<compile_context>
chip_gen: v6e
topology: v6e:2x2x1
jax: 0.10.0
libtpu: 0.0.40
codegen_flags: <defaults>
</compile_context>

<pallas_src>
from functools import partial

import jax
import jax.numpy as jnp
from jax.experimental import pallas as pl
from jax.experimental.pallas import tpu as pltpu


def _round_up(x, m):
    return (x + m - 1) // m * m


def _c2r_kernel(x_ref, w_ref, b_ref, o_ref):
    # One fused MXU pass per row tile: (tm, 2*in) @ (2*in, n_out) + (1, n_out).
    # Default MXU precision (bf16 passes, f32 accumulate); the algebraic weight
    # fusion also reassociates fp32 sums, so expect ~1e-5 deviation from the
    # unfused fp32 chain (asserted at 1e-4 below; error grows with input_dim).
    acc = jnp.dot(x_ref[...], w_ref[...], preferred_element_type=jnp.float32)
    o_ref[...] = (acc + b_ref[...]).astype(o_ref.dtype)


def fuse_complex_to_real_params(wr, br, wi, bi, wc, bc):
    """One-time algebraic fusion of the three Linears (PyTorch (out, in) layout).

    Collapses
        y = cat(x_re @ wr.T + br, x_im @ wi.T + bi) @ wc.T + bc
    into a single matmul
        y = x_interleaved @ w_fused + b_fused
    where x_interleaved has columns [re0, im0, re1, im1, ...] (complex64's native
    memory layout).  Call ONCE per weight set -- hoisted out of the forward path.
    """
    output_dim, input_dim = wr.shape
    hp = jax.lax.Precision.HIGHEST

    wc_t = wc.T.astype(jnp.float32)                       # (2*out, out)
    wc_r = wc_t[:output_dim, :]                           # acts on the real branch
    wc_i = wc_t[output_dim:, :]                           # acts on the imag branch
    w_fr = jnp.dot(wr.T.astype(jnp.float32), wc_r, precision=hp)   # (in, out)
    w_fi = jnp.dot(wi.T.astype(jnp.float32), wc_i, precision=hp)   # (in, out)
    b_f = (jnp.dot(br.astype(jnp.float32), wc_r, precision=hp)
           + jnp.dot(bi.astype(jnp.float32), wc_i, precision=hp)
           + bc.astype(jnp.float32))                      # (out,)

    # Lane-dense (unmasked vst) output only when the write amplification is
    # modest (<25%); e.g. out=32 -> 128 would 4x output HBM bytes plus add a
    # post-slice pass, so small outputs keep their natural width (masked vst).
    n_pad = _round_up(output_dim, 128)
    if n_pad != output_dim and (n_pad - output_dim) * 4 < output_dim:
        w_fr = jnp.pad(w_fr, ((0, 0), (0, n_pad - output_dim)))
        w_fi = jnp.pad(w_fi, ((0, 0), (0, n_pad - output_dim)))
        b_f = jnp.pad(b_f, (0, n_pad - output_dim))
        n_out = n_pad
    else:
        n_out = output_dim

    # Interleave weight rows [w_fr[0], w_fi[0], w_fr[1], w_fi[1], ...] to match
    # the interleaved [re, im] activation columns.
    w_fused = jnp.stack([w_fr, w_fi], axis=1).reshape(2 * input_dim, n_out)
    b_fused = b_f.reshape(1, n_out)
    return w_fused, b_fused


@partial(jax.jit, static_argnames=("output_dim", "tm_target"))
def complex_to_real_fused(x_complex, w_fused, b_fused, *, output_dim,
                          tm_target=1024):
    """ComplexToReal forward with pre-fused weights (fuse_complex_to_real_params)."""
    input_dim = x_complex.shape[-1]
    lead_shape = x_complex.shape[:-1]
    M = 1
    for d in lead_shape:
        M *= int(d)
    M = max(M, 1)
    k2 = 2 * input_dim
    n_out = w_fused.shape[1]

    # Interleaved activations [re0, im0, ...]: a single fused XLA copy matching
    # complex64's native layout (no strided real/imag extracts + feature concat).
    # TODO(synk): Mosaic cannot consume complex64 refs directly, so this one
    # (fused) XLA pass over the activations stays in the wrapper.
    real = jnp.real(x_complex).astype(jnp.float32)
    imag = jnp.imag(x_complex).astype(jnp.float32)
    x_inter = jnp.stack([real, imag], axis=-1).reshape(M, k2)

    # Row tiling: no explicit pad of M -- Pallas masks the ragged final block.
    m8 = _round_up(M, 8)
    if m8 <= tm_target:
        # Single-tile regime; once there is enough work, split into two tiles so
        # the "parallel" row axis can shard across v7x's two TensorCores.
        tm = _round_up(-(-m8 // 2), 8) if m8 >= 512 else m8
    else:
        tm = tm_target              # M > tm_target  =>  grid >= 2 steps anyway
    grid = (pl.cdiv(M, tm),)

    # NOTE: for very large input/output dims on v7x (64 MiB VMEM / 32 MiB scoped
    # default), shrink tm_target or add a K grid axis ("arbitrary" + f32 acc
    # scratch) instead of keeping the whole (2*in, n_out) weight resident;
    # irrelevant at these sizes (weight tile here is a few KiB).
    out = pl.pallas_call(
        _c2r_kernel,
        out_shape=jax.ShapeDtypeStruct((M, n_out), jnp.float32),
        grid_spec=pltpu.PrefetchScalarGridSpec(
            num_scalar_prefetch=0,
            grid=grid,
            in_specs=[
                pl.BlockSpec((tm, k2), lambda i: (i, 0)),      # activation rows
                pl.BlockSpec((k2, n_out), lambda i: (0, 0)),   # fused weight (resident)
                pl.BlockSpec((1, n_out), lambda i: (0, 0)),    # fused bias   (resident)
            ],
            out_specs=pl.BlockSpec((tm, n_out), lambda i: (i, 0)),
        ),
        compiler_params=pltpu.CompilerParams(
            dimension_semantics=("parallel",)),
    )(x_inter, w_fused, b_fused)

    if n_out != output_dim:
        out = out[:, :output_dim]
    return out.reshape(*lead_shape, output_dim)


def _init_linear(key, out_dim, in_dim):
    # Deterministic init mimicking nn.Linear: U(-1/sqrt(in), 1/sqrt(in))
    kw, kb = jax.random.split(key)
    bound = 1.0 / jnp.sqrt(jnp.float32(in_dim))
    w = jax.random.uniform(kw, (out_dim, in_dim), jnp.float32, -bound, bound)
    b = jax.random.uniform(kb, (out_dim,), jnp.float32, -bound, bound)
    return w, b


if __name__ == "__main__":
    key = jax.random.PRNGKey(0)
    k_x_re, k_x_im, k_r, k_i, k_c = jax.random.split(key, 5)

    batch, seq = 2, 8
    input_dim, output_dim = 32, 32

    x_real = jax.random.normal(k_x_re, (batch, seq, input_dim), jnp.float32)
    x_imag = jax.random.normal(k_x_im, (batch, seq, input_dim), jnp.float32)
    x_complex = (x_real + 1j * x_imag).astype(jnp.complex64)

    wr, br = _init_linear(k_r, output_dim, input_dim)
    wi, bi = _init_linear(k_i, output_dim, input_dim)
    wc, bc = _init_linear(k_c, output_dim, 2 * output_dim)

    # One-time weight fusion (hoisted out of the per-call forward path).
    w_fused, b_fused = fuse_complex_to_real_params(wr, br, wi, bi, wc, bc)

    out = complex_to_real_fused(x_complex, w_fused, b_fused, output_dim=output_dim)
    jax.block_until_ready(out)

    # Pure-JAX reference: the original unfused chain at highest precision.
    hp = jax.lax.Precision.HIGHEST
    ro = jnp.dot(x_real.reshape(-1, input_dim), wr.T, precision=hp) + br
    io = jnp.dot(x_imag.reshape(-1, input_dim), wi.T, precision=hp) + bi
    comb = jnp.concatenate([ro, io], axis=-1)
    ref = (jnp.dot(comb, wc.T, precision=hp) + bc).reshape(batch, seq, output_dim)

    assert out.shape == (batch, seq, output_dim)
    # Algebraic fusion reassociates fp32 sums -> tiny (<1e-5) differences expected.
    assert jnp.allclose(out, ref, atol=1e-4, rtol=1e-4), (
        float(jnp.max(jnp.abs(out - ref))))

    print("KERNEL_OK")
</pallas_src>

<mosaic_0001>
module attributes {stable_mosaic.version = 11 : i64} {
  func.func @_c2r_kernel(%arg0: i32, %arg1: memref<16x64xf32, #tpu.memory_space<vmem>>, %arg2: memref<64x32xf32, #tpu.memory_space<vmem>>, %arg3: memref<1x32xf32, #tpu.memory_space<vmem>>, %arg4: memref<16x32xf32, #tpu.memory_space<vmem>>) attributes {dimension_semantics = [#tpu.dimension_semantics<parallel>], iteration_bounds = array<i64: 1>, scalar_prefetch = 0 : i64, scratch_operands = 0 : i64, tpu.core_type = #tpu.core_type<tc>, window_params = [{transform_indices = @transform_0, window_bounds = array<i64: 16, 64>}, {pipeline_mode = #tpu.pipeline_mode<synchronous>, transform_indices = @transform_1, window_bounds = array<i64: 64, 32>}, {pipeline_mode = #tpu.pipeline_mode<synchronous>, transform_indices = @transform_2, window_bounds = array<i64: 1, 32>}, {transform_indices = @transform_3, window_bounds = array<i64: 16, 32>}]} {
    %c0 = arith.constant 0 : index
    %c0_0 = arith.constant 0 : index
    %0 = vector.load %arg1[%c0, %c0_0] : memref<16x64xf32, #tpu.memory_space<vmem>>, vector<16x64xf32>
    %c0_1 = arith.constant 0 : index
    %c0_2 = arith.constant 0 : index
    %1 = vector.load %arg2[%c0_1, %c0_2] : memref<64x32xf32, #tpu.memory_space<vmem>>, vector<64x32xf32>
    %cst = arith.constant dense<0.000000e+00> : vector<16x32xf32>
    %2 = tpu.matmul %0, %1, %cst {dimension_numbers = #tpu.dot_dimension_numbers<[1], [0], [0], [1], [0, 0, 1, 1], [], []>} : vector<16x64xf32>, vector<64x32xf32>, vector<16x32xf32> -> vector<16x32xf32>
    %c0_3 = arith.constant 0 : index
    %c0_4 = arith.constant 0 : index
    %3 = vector.load %arg3[%c0_3, %c0_4] : memref<1x32xf32, #tpu.memory_space<vmem>>, vector<1x32xf32>
    %4 = vector.broadcast %3 : vector<1x32xf32> to vector<16x32xf32>
    %5 = arith.addf %2, %4 : vector<16x32xf32>
    %c0_5 = arith.constant 0 : index
    %c0_6 = arith.constant 0 : index
    %6 = vector.load %arg4[%c0_5, %c0_6] : memref<16x32xf32, #tpu.memory_space<vmem>>, vector<16x32xf32>
    tpu.vector_store %arg4[%c0_5, %c0_6], %5 {strides = array<i32>} : memref<16x32xf32, #tpu.memory_space<vmem>>, vector<16x32xf32>,
    return
  }
  func.func @transform_0(%arg0: i32) -> (i32, i32) {
    %c0_i32 = arith.constant 0 : i32
    %c0_i32_0 = arith.constant 0 : i32
    return %arg0, %c0_i32 : i32, i32
  }
  func.func @transform_1(%arg0: i32) -> (i32, i32) {
    %c0_i32 = arith.constant 0 : i32
    %c0_i32_0 = arith.constant 0 : i32
    %c0_i32_1 = arith.constant 0 : i32
    return %c0_i32, %c0_i32_0 : i32, i32
  }
  func.func @transform_2(%arg0: i32) -> (i32, i32) {
    %c0_i32 = arith.constant 0 : i32
    %c0_i32_0 = arith.constant 0 : i32
    %c0_i32_1 = arith.constant 0 : i32
    return %c0_i32, %c0_i32_0 : i32, i32
  }
  func.func @transform_3(%arg0: i32) -> (i32, i32) {
    %c0_i32 = arith.constant 0 : i32
    %c0_i32_0 = arith.constant 0 : i32
    return %arg0, %c0_i32 : i32, i32
  }
}

</mosaic_0001>

<llo_original>
// kernel: custom-call
$region0: #{custom-call}
  %s0 = inlined_call_operand.hbm [shape: c64[2,8,32], index: 0, kind: input, shape index: {}]
  %s1 = inlined_call_operand.vmem [shape: f32[2,8,32], index: 1, kind: output, shape index: {}]
  $region1: #{custom-call} parent=0
    #allocation0 [shape = 's32[1]{0}', space=sflag, size = 0x4, scoped, tag = 'scoped memory for custom-call']
    %2 = vsyncpa [#allocation0], 0
    %s3 = sshll.u32 %s1, 4
    %s4 = int_to_ptr.vmem [resolvable:$true] %s3
    %6 = dma.hbm_to_vmem [thread:$0]  %s0, 256, %s4, [#allocation0]
    %7 = dma.done [#allocation0], 256
    %8 = vsyncpa [#allocation0], 1

// kernel: custom-call.1
$region0: #{custom-call.1}
  %s0 = inlined_call_operand.hbm [shape: c64[2,8,32], index: 0, kind: input, shape index: {}]
  %s1 = inlined_call_operand.vmem [shape: f32[2,8,32], index: 1, kind: output, shape index: {}]
  %s2 = scalar_lea.hbm %s0, 256
  $region1: #{custom-call.1} parent=0
    #allocation0 [shape = 's32[1]{0}', space=sflag, size = 0x4, scoped, tag = 'scoped memory for custom-call.1']
    %3 = vsyncpa [#allocation0], 0
    %s4 = sshll.u32 %s1, 4
    %s5 = int_to_ptr.vmem [resolvable:$true] %s4
    %7 = dma.hbm_to_vmem [thread:$0]  %s2, 256, %s5, [#allocation0]
    %8 = dma.done [#allocation0], 256
    %9 = vsyncpa [#allocation0], 1

// kernel: complex_to_real_fused.1
$region0: #{complex_to_real_fused.1}
  #allocation0 [shape = 'u32[]', space=smem, size = 0x4, offset = 0x4, fixed_abs, tag = 'smem constant byte address 0x4 - core index']
  #allocation1 [shape = 'u32[144,128]{1,0:T(1,128)}', space=vmem, size = 0x12000, scoped, tag = 'internal scratch']
  %s0 = inlined_call_operand.vmem [shape: f32[16,64], index: 0, kind: input, shape index: {}]
  %s1 = inlined_call_operand.vmem [shape: f32[64,32], index: 1, kind: input, shape index: {}]
  %s2 = inlined_call_operand.vmem [shape: f32[1,32], index: 2, kind: input, shape index: {}]
  %s3 = inlined_call_operand.hbm [shape: f32[16,32], index: 3, kind: output, shape index: {}]
  %s4 = sld [smem:[#allocation0]]
  $region22: #{complex_to_real_fused.1} parent=0
    _
  %s6 = ssub.s32 1, %s4
  %s7 = scalar_select 0, %s6, %s4
  $region1: #{complex_to_real_fused.1} parent=0
    #allocation2 [shape = 'u8[8192]{0}', space=vmem, size = 0x2000, scoped, tag = 'output window, operand 0, single buffered']
    #allocation3 [shape = 's32[1]{0}', space=sflag, size = 0x4, scoped, tag = 'scoped memory for complex_to_real_fused.1']
    %8 = vsyncpa [#allocation3], 0
    // Predicated region
    $region2: #{complex_to_real_fused.1} parent=1 // pred_check
      _
    $region3: #{complex_to_real_fused.1} parent=1 // pred_check_branch
      %10 = sbr.rel (0) target = $region5
    $region4: #{complex_to_real_fused.1} parent=1 // pred_region
      _
    $region5: #{complex_to_real_fused.1} parent=1 // pred_fallthru
      _
    // Predicated region
    $region6: #{complex_to_real_fused.1} parent=1 // pred_check
      _
    $region7: #{complex_to_real_fused.1} parent=1 // pred_check_branch
      %12 = sbr.rel (0) target = $region9
    $region8: #{complex_to_real_fused.1} parent=1 // pred_region
      _
    $region9: #{complex_to_real_fused.1} parent=1 // pred_fallthru
      _
    // Predicated region
    $region10: #{complex_to_real_fused.1} parent=1 // pred_check
      _
    $region11: #{complex_to_real_fused.1} parent=1 // pred_check_branch
      %14 = sbr.rel (0) target = $region13
    $region12: #{complex_to_real_fused.1} parent=1 // pred_region
      _
    $region13: #{complex_to_real_fused.1} parent=1 // pred_fallthru
      _
    %v15 = vld [vmem:[%s0] sm:$0xff]
    %v16 = vld [vmem:[%s0 + $0x8] sm:$0xff]
    %v17 = vld [vmem:[%s1] sm:$0xff]
    %v18 = vld [vmem:[%s1 + $0x8] sm:$0xff]
    %v19 = vld [vmem:[%s1 + $0x10] sm:$0xff]
    %v20 = vld [vmem:[%s1 + $0x18] sm:$0xff]
    %v21 = vld [vmem:[%s1 + $0x20] sm:$0xff]
    %v22 = vld [vmem:[%s1 + $0x28] sm:$0xff]
    %v23 = vld [vmem:[%s1 + $0x30] sm:$0xff]
    %v24 = vld [vmem:[%s1 + $0x38] sm:$0xff]
    %v25 = vld [vmem:[%s2] sm:$0x1]
    %v27 = vlaneseq
    %v28 = vshrl.u32 %v27, 7
    %v29 = vsub.s32 0, %v28
    %v30 = vrot.slane %v25, %v29
    %vm32 = vcmask 523264
    %v34 = vsel %vm32, %v15, 0
    %v37 = vsel %vm32, %v16, 0
    %39 = vmatprep.subr.mxu0 0.0
    %40 = vmatpush1.msra.mxu0 0.0
    %41 = vmatprep.subr.mxu0 0.0
    %42 = vmatpush1.msra.mxu0 0.0
    %43 = vmatprep.subr.mxu0 0.0
    %44 = vmatpush1.msra.mxu0 0.0
    %45 = vmatprep.subr.mxu0 0.0
    %46 = vmatpush1.msra.mxu0 0.0
    %47 = vmatprep.subr.mxu0 0.0
    %48 = vmatpush1.msra.mxu0 0.0
    %49 = vmatprep.subr.mxu0 0.0
    %50 = vmatpush1.msra.mxu0 0.0
    %51 = vmatprep.subr.mxu0 0.0
    %52 = vmatpush1.msra.mxu0 0.0
    %53 = vmatprep.subr.mxu0 0.0
    %54 = vmatpush1.msra.mxu0 0.0
    %55 = vmatprep.subr.mxu0 0.0
    %56 = vmatpush1.msra.mxu0 %v24
    %57 = vmatprep.subr.mxu0 0.0
    %58 = vmatpush1.msra.mxu0 %v23
    %59 = vmatprep.subr.mxu0 0.0
    %60 = vmatpush1.msra.mxu0 %v22
    %61 = vmatprep.subr.mxu0 0.0
    %62 = vmatpush1.msra.mxu0 %v21
    %63 = vmatprep.subr.mxu0 0.0
    %64 = vmatpush1.msra.mxu0 %v20
    %65 = vmatprep.subr.mxu0 0.0
    %66 = vmatpush1.msra.mxu0 %v19
    %67 = vmatprep.subr.mxu0 0.0
    %68 = vmatpush1.msra.mxu0 %v18
    %69 = vmatprep.subr.mxu0 0.0
    %70 = vmatpush1.msra.mxu0 %v17
    %71 = vmatprep.subr.mxu0 0.0
    %72 = vmatpush2.msra.mxu0 0.0
    %73 = vmatprep.subr.mxu0 0.0
    %74 = vmatpush2.msra.mxu0 0.0
    %75 = vmatprep.subr.mxu0 0.0
    %76 = vmatpush2.msra.mxu0 0.0
    %77 = vmatprep.subr.mxu0 0.0
    %78 = vmatpush2.msra.mxu0 0.0
    %79 = vmatprep.subr.mxu0 0.0
    %80 = vmatpush2.msra.mxu0 0.0
    %81 = vmatprep.subr.mxu0 0.0
    %82 = vmatpush2.msra.mxu0 0.0
    %83 = vmatprep.subr.mxu0 0.0
    %84 = vmatpush2.msra.mxu0 0.0
    %85 = vmatprep.subr.mxu0 0.0
    %86 = vmatpush2.msra.mxu0 0.0
    %87 = vmatprep.subr.mxu0 0.0
    %88 = vmatpush2.msra.mxu0 0.0
    %89 = vmatprep.subr.mxu0 0.0
    %90 = vmatpush2.msra.mxu0 0.0
    %91 = vmatprep.subr.mxu0 0.0
    %92 = vmatpush2.msra.mxu0 0.0
    %93 = vmatprep.subr.mxu0 0.0
    %94 = vmatpush2.msra.mxu0 0.0
    %95 = vmatprep.subr.mxu0 0.0
    %96 = vmatpush2.msra.mxu0 0.0
    %97 = vmatprep.subr.mxu0 0.0
    %98 = vmatpush2.msra.mxu0 0.0
    %99 = vmatprep.subr.mxu0 0.0
    %100 = vmatpush2.msra.mxu0 0.0
    %101 = vmatprep.subr.mxu0 0.0
    %102 = vmatpush2.msra.mxu0 0.0
    %103 = vmatprep.mubr.f32.mxu0 0.0
    %104 = vmatmul.mubr.f32.gmra.mxu0 %v34
    %v105 = vpop.f32.mrf.mxu0
    %v106 = vadd.f32 %v30, %v105
    %v107 = vpop.f32.mrf.mxu0
    %108 = vmatprep.mubr.f32.mxu0 0.0
    %109 = vmatmul.mubr.f32.gmra.mxu0 %v37
    %v110 = vpop.f32.mrf.mxu0
    %v111 = vadd.f32 %v30, %v110
    %v112 = vpop.f32.mrf.mxu0
    %113 = vdwg.mxu0
    %vm114 = vcmask 261120
    %115 = vst.msk [vmem:[#allocation2] sm:$0xff] %vm114, %v106
    %116 = vst.msk [vmem:[#allocation2 + $0x8] sm:$0xff] %vm114, %v111
    // Predicated region
    $region14: #{complex_to_real_fused.1} parent=1 // pred_check
      _
    $region15: #{complex_to_real_fused.1} parent=1 // pred_check_branch
      %118 = sbr.rel (0) target = $region17
    $region16: #{complex_to_real_fused.1} parent=1 // pred_region
      %s120 = ssub.s32 256, 256
      %121 = vsyncadd [#allocation3], %s120
      %s122 = sshll.u32 [#allocation2], 4
      %s123 = int_to_ptr.vmem [resolvable:$true] %s122
      %128 = dma.vmem_to_hbm [thread:$0]  %s123, 256, %s3, [#allocation3], 128, 128, 8
    $region17: #{complex_to_real_fused.1} parent=1 // pred_fallthru
      _
    // Predicated region
    $region18: #{complex_to_real_fused.1} parent=1 // pred_check
      _
    $region19: #{complex_to_real_fused.1} parent=1 // pred_check_branch
      %130 = sbr.rel (0) target = $region21
    $region20: #{complex_to_real_fused.1} parent=1 // pred_region
      %131 = dma.done [#allocation3], 256
    $region21: #{complex_to_real_fused.1} parent=1 // pred_fallthru
      _
    %132 = vsyncpa [#allocation3], 1

</llo_original>
